<compile_context>
chip_gen: v7x
topology: tpu7x:2x2x1
jax: 0.10.0
libtpu: 0.0.40
codegen_flags: <defaults>
</compile_context>

<pallas_src>
import math

import jax
import jax.numpy as jnp
from jax.experimental import pallas as pl
from jax.experimental.pallas import tpu as pltpu

_EPS = 1e-5   # matches the PyTorch module (1e-05)


# ----------------------------- kernel ---------------------------------------

def withbias_layernorm_kernel(x_ref, w_ref, b_ref, o_ref):
    x = x_ref[...].astype(jnp.float32)                    # (bm, C) fp32 compute
    mu = jnp.mean(x, axis=-1, keepdims=True)              # (bm, 1)
    xc = x - mu
    var = jnp.mean(xc * xc, axis=-1, keepdims=True)       # two-pass: var >= 0
    inv = jax.lax.rsqrt(var + _EPS)                       # EUP rsqrt
    w = w_ref[...].astype(jnp.float32)                    # (1, C)
    b = b_ref[...].astype(jnp.float32)                    # (1, C)
    o_ref[...] = (xc * inv * w + b).astype(o_ref.dtype)


# ----------------------------- wrapper ---------------------------------------

def _choose_block_rows(rows, C, itemsize, block_rows):
    """Pick a row tile: multiple of 8, >=2 grid steps if possible, VMEM-safe."""
    # Double-buffered input + output tiles: ~4 * bm * C * itemsize bytes.
    vmem_budget = 12 * 1024 * 1024               # under v5e's 16 MiB scoped default
    bm_vmem = max(8, vmem_budget // (4 * C * max(itemsize, 1)))
    bm = min(block_rows, rows, bm_vmem)
    # Ensure at least 2 grid steps so both v7x TensorCores get work.
    bm = min(bm, max(8, pl.cdiv(rows, 2)))
    # Round up to a sublane multiple (8); ragged last tile is masked by Pallas.
    bm = max(8, ((bm + 7) // 8) * 8)
    return bm


def withbias_layernorm(x, weight, bias, *, block_rows=4096):
    """x: (..., C); weight, bias: (C,). Normalizes over the last dim."""
    orig_shape = x.shape
    C = orig_shape[-1]
    rows = math.prod(orig_shape[:-1]) if len(orig_shape) > 1 else 1

    x2 = x.reshape(rows, C)                      # native dtype, no extra HBM pass
    w2 = weight.reshape(1, C)
    b2 = bias.reshape(1, C)

    bm = _choose_block_rows(rows, C, jnp.dtype(x.dtype).itemsize, block_rows)
    grid = (pl.cdiv(rows, bm),)                  # ragged edge handled by masking

    out = pl.pallas_call(
        withbias_layernorm_kernel,
        out_shape=jax.ShapeDtypeStruct((rows, C), x.dtype),   # native output dtype
        grid=grid,
        in_specs=[
            pl.BlockSpec((bm, C), lambda i: (i, 0)),   # activation row tile
            pl.BlockSpec((1, C), lambda i: (0, 0)),    # weight (grid-invariant)
            pl.BlockSpec((1, C), lambda i: (0, 0)),    # bias   (grid-invariant)
        ],
        out_specs=pl.BlockSpec((bm, C), lambda i: (i, 0)),
        compiler_params=pltpu.CompilerParams(
            dimension_semantics=("parallel",)),        # shardable on v7x 2xTC
    )(x2, w2, b2)

    return out.reshape(orig_shape)


# --------------------------- pure-JAX reference ------------------------------

def withbias_layernorm_reference(x, weight, bias):
    xf = x.astype(jnp.float32)
    mu = xf.mean(-1, keepdims=True)
    var = ((xf - mu) ** 2).mean(-1, keepdims=True)      # unbiased=False
    return ((xf - mu) / jnp.sqrt(var + _EPS) * weight + bias).astype(x.dtype)


# ------------------------------- demo ----------------------------------------

if __name__ == "__main__":
    key = jax.random.PRNGKey(0)
    kx, kw, kb = jax.random.split(key, 3)

    # Transformer_Block applies this LayerNorm to tokens of shape (B, H*W, C)
    # (rearranged from NCHW).  Small demo: B=2, H=W=16, C=128.
    B, H, W, C = 2, 16, 16, 128
    x = jax.random.normal(kx, (B, H * W, C), dtype=jnp.float32)
    weight = 1.0 + 0.1 * jax.random.normal(kw, (C,), dtype=jnp.float32)
    bias = 0.1 * jax.random.normal(kb, (C,), dtype=jnp.float32)

    out = withbias_layernorm(x, weight, bias)
    out = jax.block_until_ready(out)

    ref = withbias_layernorm_reference(x, weight, bias)
    assert out.shape == x.shape
    assert out.dtype == x.dtype
    err = float(jnp.max(jnp.abs(out - ref)))
    if not err < 1e-4:
        raise AssertionError(f"kernel/reference mismatch: max abs err = {err}")
    print("KERNEL_OK")
</pallas_src>

<mosaic_0001>
module attributes {stable_mosaic.version = 11 : i64} {
  func.func @withbias_layernorm_kernel(%arg0: i32, %arg1: memref<256x128xf32, #tpu.memory_space<vmem>>, %arg2: memref<1x128xf32, #tpu.memory_space<vmem>>, %arg3: memref<1x128xf32, #tpu.memory_space<vmem>>, %arg4: memref<256x128xf32, #tpu.memory_space<vmem>>) attributes {dimension_semantics = [#tpu.dimension_semantics<parallel>], iteration_bounds = array<i64: 2>, scalar_prefetch = 0 : i64, scratch_operands = 0 : i64, tpu.core_type = #tpu.core_type<tc>, window_params = [{transform_indices = @transform_0, window_bounds = array<i64: 256, 128>}, {pipeline_mode = #tpu.pipeline_mode<synchronous>, transform_indices = @transform_1, window_bounds = array<i64: 1, 128>}, {pipeline_mode = #tpu.pipeline_mode<synchronous>, transform_indices = @transform_2, window_bounds = array<i64: 1, 128>}, {transform_indices = @transform_3, window_bounds = array<i64: 256, 128>}]} {
    %c0 = arith.constant 0 : index
    %c0_0 = arith.constant 0 : index
    %0 = vector.load %arg1[%c0, %c0_0] : memref<256x128xf32, #tpu.memory_space<vmem>>, vector<256x128xf32>
    %cst = arith.constant dense<0.000000e+00> : vector<256xf32>
    %1 = vector.multi_reduction <add>, %0, %cst [1] : vector<256x128xf32> to vector<256xf32>
    %2 = vector.shape_cast %1 : vector<256xf32> to vector<256x1xf32>
    %cst_1 = arith.constant 1.280000e+02 : f32
    %3 = vector.broadcast %cst_1 : f32 to vector<256x1xf32>
    %4 = arith.divf %2, %3 : vector<256x1xf32>
    %5 = vector.broadcast %4 : vector<256x1xf32> to vector<256x128xf32>
    %6 = arith.subf %0, %5 : vector<256x128xf32>
    %7 = arith.mulf %6, %6 : vector<256x128xf32>
    %cst_2 = arith.constant dense<0.000000e+00> : vector<256xf32>
    %8 = vector.multi_reduction <add>, %7, %cst_2 [1] : vector<256x128xf32> to vector<256xf32>
    %9 = vector.shape_cast %8 : vector<256xf32> to vector<256x1xf32>
    %cst_3 = arith.constant 1.280000e+02 : f32
    %10 = vector.broadcast %cst_3 : f32 to vector<256x1xf32>
    %11 = arith.divf %9, %10 : vector<256x1xf32>
    %cst_4 = arith.constant 9.99999974E-6 : f32
    %12 = vector.broadcast %cst_4 : f32 to vector<256x1xf32>
    %13 = arith.addf %11, %12 : vector<256x1xf32>
    %14 = math.rsqrt %13 : vector<256x1xf32>
    %c0_5 = arith.constant 0 : index
    %c0_6 = arith.constant 0 : index
    %15 = vector.load %arg2[%c0_5, %c0_6] : memref<1x128xf32, #tpu.memory_space<vmem>>, vector<1x128xf32>
    %c0_7 = arith.constant 0 : index
    %c0_8 = arith.constant 0 : index
    %16 = vector.load %arg3[%c0_7, %c0_8] : memref<1x128xf32, #tpu.memory_space<vmem>>, vector<1x128xf32>
    %17 = vector.broadcast %14 : vector<256x1xf32> to vector<256x128xf32>
    %18 = arith.mulf %6, %17 : vector<256x128xf32>
    %19 = vector.broadcast %15 : vector<1x128xf32> to vector<256x128xf32>
    %20 = arith.mulf %18, %19 : vector<256x128xf32>
    %21 = vector.broadcast %16 : vector<1x128xf32> to vector<256x128xf32>
    %22 = arith.addf %20, %21 : vector<256x128xf32>
    %c0_9 = arith.constant 0 : index
    %c0_10 = arith.constant 0 : index
    %23 = vector.load %arg4[%c0_9, %c0_10] : memref<256x128xf32, #tpu.memory_space<vmem>>, vector<256x128xf32>
    tpu.vector_store %arg4[%c0_9, %c0_10], %22 {strides = array<i32>} : memref<256x128xf32, #tpu.memory_space<vmem>>, vector<256x128xf32>,
    return
  }
  func.func @transform_0(%arg0: i32) -> (i32, i32) {
    %c0_i32 = arith.constant 0 : i32
    %c0_i32_0 = arith.constant 0 : i32
    return %arg0, %c0_i32 : i32, i32
  }
  func.func @transform_1(%arg0: i32) -> (i32, i32) {
    %c0_i32 = arith.constant 0 : i32
    %c0_i32_0 = arith.constant 0 : i32
    %c0_i32_1 = arith.constant 0 : i32
    return %c0_i32, %c0_i32_0 : i32, i32
  }
  func.func @transform_2(%arg0: i32) -> (i32, i32) {
    %c0_i32 = arith.constant 0 : i32
    %c0_i32_0 = arith.constant 0 : i32
    %c0_i32_1 = arith.constant 0 : i32
    return %c0_i32, %c0_i32_0 : i32, i32
  }
  func.func @transform_3(%arg0: i32) -> (i32, i32) {
    %c0_i32 = arith.constant 0 : i32
    %c0_i32_0 = arith.constant 0 : i32
    return %arg0, %c0_i32 : i32, i32
  }
}

</mosaic_0001>

<llo_original>
// kernel: tpu_custom_call.1
$region0: #{tpu_custom_call.1}
  #allocation0 [shape = 'u32[]', space=smem, size = 0x4, offset = 0x4, fixed_abs, tag = 'smem constant byte address 0x4 - core index']
  #allocation1 [shape = 'u32[144,128]{1,0:T(1,128)}', space=vmem, size = 0x12000, scoped, tag = 'internal scratch']
  %s0 = inlined_call_operand.hbm [shape: f32[512,128], index: 0, kind: input, shape index: {}]
  %s1 = inlined_call_operand.vmem [shape: f32[1,128], index: 1, kind: input, shape index: {}]
  %s2 = inlined_call_operand.vmem [shape: f32[1,128], index: 2, kind: input, shape index: {}]
  %s3 = inlined_call_operand.hbm [shape: f32[512,128], index: 3, kind: output, shape index: {}]
  %s4 = sld [smem:[#allocation0]]
  $region49: #{tpu_custom_call.1} parent=0
    _
  %s6 = ssub.s32 1, %s4
  %s7 = scalar_select 0, %s6, %s4
  $region1: #{tpu_custom_call.1} parent=0
    #allocation2 [shape = 'u8[262144]{0}', space=vmem, size = 0x40000, scoped, tag = 'input window, operand 0']
    #allocation3 [shape = 's32[2]{0}', space=sflag, size = 0x8, scoped, tag = 'scoped memory for tpu_custom_call.1']
    #allocation4 [shape = 's32[2]{0}', space=sflag, size = 0x8, scoped, tag = 'scoped memory for tpu_custom_call.1']
    #allocation5 [shape = 'u8[262144]{0}', space=vmem, size = 0x40000, scoped, tag = 'output window, operand 0']
    %8 = vsyncpa [#allocation3], 0
    %s9 = scalar_lea.sflag [#allocation3], 1
    %10 = vsyncpa %s9, 0
    %11 = vsyncpa [#allocation4], 0
    %s12 = scalar_lea.sflag [#allocation4], 1
    %13 = vsyncpa %s12, 0
    loop: start=0, step=1, limit=4
    $region2: #{tpu_custom_call.1} parent=1 // loop_pre_header
      _
    $region3: #{tpu_custom_call.1} parent=1 // loop_header
      %s15 = sphi 0, %s19
      %p16 = scmp.ge.s32.totalorder %s15, 4
      %s25 = sphi 0, %s27
      %s28 = sphi 0, %s25
      %s29 = sphi 0, %s28
      %s45 = sphi 0, %s29
      %s49 = sphi 0, %s49
      %s51 = sphi 0, %s49
      %s52 = sphi 0, %s51
      %s66 = sphi 0, %s52
      %s70 = sphi 0, %s70
      %s72 = sphi 0, %s70
      %s73 = sphi 0, %s72
      %s87 = sphi 0, %s73
      %s93 = sphi 0, %s95
      %s96 = sphi 0, %s93
      %s97 = sphi 0, %s96
      %s113 = sphi 0, %s97
    $region4: #{tpu_custom_call.1} parent=1 // loop_header_branch
      %18 = sbr.rel (%p16) target = $region8
    $region5: #{tpu_custom_call.1} parent=1 // loop_body
      %s20 = ssub.s32 %s15, 1
      %s21 = ssub.s32 %s15, 2
      %s22 = sadd.s32 %s15, 1
      %s23 = ssub.s32 %s15, %s22
      %p24 = scmp.eq.s32.totalorder %s23, 0
      %s26 = sadd.s32 %s25, 1
      %s27 = scalar_select %p24, %s25, %s26
      %p30 = pneg %p24
      %p31 = scmp.eq.s32.totalorder %s15, 1
      %p32 = por %p30, %p31
      %p33 = scmp.ne.s32.totalorder %s25, %s28
      %p34 = scmp.eq.s32.totalorder %s15, 0
      %p35 = por %p33, %p34
      %p36 = scmp.ne.s32.totalorder %s25, %s28
      %p37 = scmp.eq.s32.totalorder %s20, 1
      %p38 = por %p36, %p37
      %p39 = scmp.ne.s32.totalorder %s28, %s29
      %p40 = scmp.eq.s32.totalorder %s20, 0
      %p41 = por %p39, %p40
      %p42 = scmp.ne.s32.totalorder %s28, %s29
      %p43 = scmp.eq.s32.totalorder %s21, 1
      %p44 = por %p42, %p43
      %p46 = scmp.ne.s32.totalorder %s29, %s45
      %p47 = scmp.eq.s32.totalorder %s21, 0
      %p48 = por %p46, %p47
      %s50 = sadd.s32 %s49, 1
      %p53 = scmp.eq.s32.totalorder %s15, 1
      %p54 = scmp.ne.s32.totalorder %s49, %s51
      %p55 = scmp.eq.s32.totalorder %s15, 0
      %p56 = por %p54, %p55
      %p57 = scmp.ne.s32.totalorder %s49, %s51
      %p58 = scmp.eq.s32.totalorder %s20, 1
      %p59 = por %p57, %p58
      %p60 = scmp.ne.s32.totalorder %s51, %s52
      %p61 = scmp.eq.s32.totalorder %s20, 0
      %p62 = por %p60, %p61
      %p63 = scmp.ne.s32.totalorder %s51, %s52
      %p64 = scmp.eq.s32.totalorder %s21, 1
      %p65 = por %p63, %p64
      %p67 = scmp.ne.s32.totalorder %s52, %s66
      %p68 = scmp.eq.s32.totalorder %s21, 0
      %p69 = por %p67, %p68
      %s71 = sadd.s32 %s70, 1
      %p74 = scmp.eq.s32.totalorder %s15, 1
      %p75 = scmp.ne.s32.totalorder %s70, %s72
      %p76 = scmp.eq.s32.totalorder %s15, 0
      %p77 = por %p75, %p76
      %p78 = scmp.ne.s32.totalorder %s70, %s72
      %p79 = scmp.eq.s32.totalorder %s20, 1
      %p80 = por %p78, %p79
      %p81 = scmp.ne.s32.totalorder %s72, %s73
      %p82 = scmp.eq.s32.totalorder %s20, 0
      %p83 = por %p81, %p82
      %p84 = scmp.ne.s32.totalorder %s72, %s73
      %p85 = scmp.eq.s32.totalorder %s21, 1
      %p86 = por %p84, %p85
      %p88 = scmp.ne.s32.totalorder %s73, %s87
      %p89 = scmp.eq.s32.totalorder %s21, 0
      %p90 = por %p88, %p89
      %s91 = ssub.s32 %s15, %s22
      %p92 = scmp.eq.s32.totalorder %s91, 0
      %s94 = sadd.s32 %s93, 1
      %s95 = scalar_select %p92, %s93, %s94
      %p98 = pneg %p92
      %p99 = scmp.eq.s32.totalorder %s15, 1
      %p100 = por %p98, %p99
      %p101 = scmp.ne.s32.totalorder %s93, %s96
      %p102 = scmp.eq.s32.totalorder %s15, 0
      %p103 = por %p101, %p102
      %p104 = scmp.ne.s32.totalorder %s93, %s96
      %p105 = scmp.eq.s32.totalorder %s20, 1
      %p106 = por %p104, %p105
      %p107 = scmp.ne.s32.totalorder %s96, %s97
      %p108 = scmp.eq.s32.totalorder %s20, 0
      %p109 = por %p107, %p108
      %p110 = scmp.ne.s32.totalorder %s96, %s97
      %p111 = scmp.eq.s32.totalorder %s21, 1
      %p112 = por %p110, %p111
      %p114 = scmp.ne.s32.totalorder %s97, %s113
      %p115 = scmp.eq.s32.totalorder %s21, 0
      %p116 = por %p114, %p115
      %p117 = scmp.le.s32.totalorder 1, %s15
      %p118 = scmp.lt.s32.totalorder %s15, 3
      %p119 = pnand %p117, %p118
      %p120 = pneg %p119
      // Predicated region
      $region9: #{tpu_custom_call.1} parent=5 // pred_check
        _
      $region10: #{tpu_custom_call.1} parent=5 // pred_check_branch
        %122 = sbr.rel (%p119) target = $region12
      $region11: #{tpu_custom_call.1} parent=5 // pred_region
        %s123 = ssub.s32 %s15, 1
        // Predicated region
        $region13: #{tpu_custom_call.1} parent=11 // pred_check
          %p124 = pneg %p62
        $region14: #{tpu_custom_call.1} parent=11 // pred_check_branch
          %126 = sbr.rel (%p124) target = $region16
        $region15: #{tpu_custom_call.1} parent=11 // pred_region
          _
        $region16: #{tpu_custom_call.1} parent=11 // pred_fallthru
          _
        // Predicated region
        $region17: #{tpu_custom_call.1} parent=11 // pred_check
          %p127 = pneg %p83
        $region18: #{tpu_custom_call.1} parent=11 // pred_check_branch
          %129 = sbr.rel (%p127) target = $region20
        $region19: #{tpu_custom_call.1} parent=11 // pred_region
          _
        $region20: #{tpu_custom_call.1} parent=11 // pred_fallthru
          _
      $region12: #{tpu_custom_call.1} parent=5 // pred_fallthru
        _
      %p130 = scmp.lt.s32.totalorder %s15, 2
      // Predicated region
      $region21: #{tpu_custom_call.1} parent=5 // pred_check
        %p131 = pneg %p130
      $region22: #{tpu_custom_call.1} parent=5 // pred_check_branch
        %133 = sbr.rel (%p131) target = $region24
      $region23: #{tpu_custom_call.1} parent=5 // pred_region
        // Predicated region
        $region25: #{tpu_custom_call.1} parent=23 // pred_check
          %p134 = pneg %p35
        $region26: #{tpu_custom_call.1} parent=23 // pred_check_branch
          %136 = sbr.rel (%p134) target = $region28
        $region27: #{tpu_custom_call.1} parent=23 // pred_region
          %s137 = sand.u32 %s25, 1
          %s138 = scalar_lea.sflag [#allocation3], %s137
          %s139 = sand.u32 %s25, 1
          %s140 = smul.addr %s139, 256
          %s141 = scalar_lea.vmem [#allocation2], %s140
          %s142 = smul.u32 32, %s15
          %s144 = ssub.s32 4096, 4096
          %145 = vsyncadd %s138, %s144
          %s146 = smul.addr %s142, 128
          %s147 = scalar_lea.hbm %s0, %s146
          %s148 = sshll.u32 %s141, 4
          %s149 = int_to_ptr.vmem [resolvable:$true] %s148
          %154 = dma.hbm_to_vmem [thread:$0]  %s147, 4096, %s149, %s138, 128, 128, 8
        $region28: #{tpu_custom_call.1} parent=23 // pred_fallthru
          _
      $region24: #{tpu_custom_call.1} parent=5 // pred_fallthru
        _
      %p155 = scmp.le.s32.totalorder 1, %s15
      %p156 = scmp.lt.s32.totalorder %s15, 3
      %p157 = pnand %p155, %p156
      %p158 = pneg %p157
      // Predicated region
      $region29: #{tpu_custom_call.1} parent=5 // pred_check
        _
      $region30: #{tpu_custom_call.1} parent=5 // pred_check_branch
        %160 = sbr.rel (%p157) target = $region32
      $region31: #{tpu_custom_call.1} parent=5 // pred_region
        %s161 = ssub.s32 %s15, 1
        %s162 = sand.u32 %s28, 1
        %s163 = scalar_lea.sflag [#allocation3], %s162
        %s164 = sand.u32 %s28, 1
        %s165 = smul.addr %s164, 256
        %s166 = scalar_lea.vmem [#allocation2], %s165
        // Predicated region
        $region33: #{tpu_custom_call.1} parent=31 // pred_check
          %p167 = pneg %p41
        $region34: #{tpu_custom_call.1} parent=31 // pred_check_branch
          %169 = sbr.rel (%p167) target = $region36
        $region35: #{tpu_custom_call.1} parent=31 // pred_region
          %170 = dma.done %s163, 4096
        $region36: #{tpu_custom_call.1} parent=31 // pred_fallthru
          _
        %s171 = sand.u32 %s28, 1
        %s172 = scalar_lea.sflag [#allocation3], %s171
        %s173 = sand.u32 %s28, 1
        %s174 = smul.addr %s173, 256
        %s175 = scalar_lea.vmem [#allocation2], %s174
        %p176 = pneg %p41
        %p177 = pneg %p38
        %p178 = pneg %p62
        %p179 = pneg %p59
        %p180 = pneg %p83
        %p181 = pneg %p80
        %p182 = pneg %p109
        %p183 = pneg %p106
        %s184 = sand.u32 %s96, 1
        %s185 = scalar_lea.sflag [#allocation4], %s184
        %s186 = sand.u32 %s96, 1
        %s187 = smul.addr %s186, 256
        %s188 = scalar_lea.vmem [#allocation5], %s187
        %s189 = smul.u32 32, %s20
        %s190 = smul.u32 32, %s20
        %v191 = vld [vmem:[%s166] sm:$0xff]
        %v192 = vld [vmem:[%s166 + $0x8] sm:$0xff]
        %v193 = vld [vmem:[%s166 + $0x10] sm:$0xff]
        %v194 = vld [vmem:[%s166 + $0x18] sm:$0xff]
        %v195 = vld [vmem:[%s166 + $0x20] sm:$0xff]
        %v196 = vld [vmem:[%s166 + $0x28] sm:$0xff]
        %v197 = vld [vmem:[%s166 + $0x30] sm:$0xff]
        %v198 = vld [vmem:[%s166 + $0x38] sm:$0xff]
        %v199 = vld [vmem:[%s166 + $0x40] sm:$0xff]
        %v200 = vld [vmem:[%s166 + $0x48] sm:$0xff]
        %v201 = vld [vmem:[%s166 + $0x50] sm:$0xff]
        %v202 = vld [vmem:[%s166 + $0x58] sm:$0xff]
        %v203 = vld [vmem:[%s166 + $0x60] sm:$0xff]
        %v204 = vld [vmem:[%s166 + $0x68] sm:$0xff]
        %v205 = vld [vmem:[%s166 + $0x70] sm:$0xff]
        %v206 = vld [vmem:[%s166 + $0x78] sm:$0xff]
        %v207 = vld [vmem:[%s166 + $0x80] sm:$0xff]
        %v208 = vld [vmem:[%s166 + $0x88] sm:$0xff]
        %v209 = vld [vmem:[%s166 + $0x90] sm:$0xff]
        %v210 = vld [vmem:[%s166 + $0x98] sm:$0xff]
        %v211 = vld [vmem:[%s166 + $0xa0] sm:$0xff]
        %v212 = vld [vmem:[%s166 + $0xa8] sm:$0xff]
        %v213 = vld [vmem:[%s166 + $0xb0] sm:$0xff]
        %v214 = vld [vmem:[%s166 + $0xb8] sm:$0xff]
        %v215 = vld [vmem:[%s166 + $0xc0] sm:$0xff]
        %v216 = vld [vmem:[%s166 + $0xc8] sm:$0xff]
        %v217 = vld [vmem:[%s166 + $0xd0] sm:$0xff]
        %v218 = vld [vmem:[%s166 + $0xd8] sm:$0xff]
        %v219 = vld [vmem:[%s166 + $0xe0] sm:$0xff]
        %v220 = vld [vmem:[%s166 + $0xe8] sm:$0xff]
        %v221 = vld [vmem:[%s166 + $0xf0] sm:$0xff]
        %v222 = vld [vmem:[%s166 + $0xf8] sm:$0xff]
        %223 = vadd.xlane.f32.xlu0 %v191
        %v224 = vpop.xlane.xlu0 %223
        %225 = vadd.xlane.f32.xlu0 %v192
        %v226 = vpop.xlane.xlu0 %225
        %227 = vadd.xlane.f32.xlu0 %v193
        %v228 = vpop.xlane.xlu0 %227
        %229 = vadd.xlane.f32.xlu0 %v194
        %v230 = vpop.xlane.xlu0 %229
        %231 = vadd.xlane.f32.xlu0 %v195
        %v232 = vpop.xlane.xlu0 %231
        %233 = vadd.xlane.f32.xlu0 %v196
        %v234 = vpop.xlane.xlu0 %233
        %235 = vadd.xlane.f32.xlu0 %v197
        %v236 = vpop.xlane.xlu0 %235
        %237 = vadd.xlane.f32.xlu0 %v198
        %v238 = vpop.xlane.xlu0 %237
        %239 = vadd.xlane.f32.xlu0 %v199
        %v240 = vpop.xlane.xlu0 %239
        %241 = vadd.xlane.f32.xlu0 %v200
        %v242 = vpop.xlane.xlu0 %241
        %243 = vadd.xlane.f32.xlu0 %v201
        %v244 = vpop.xlane.xlu0 %243
        %245 = vadd.xlane.f32.xlu0 %v202
        %v246 = vpop.xlane.xlu0 %245
        %247 = vadd.xlane.f32.xlu0 %v203
        %v248 = vpop.xlane.xlu0 %247
        %249 = vadd.xlane.f32.xlu0 %v204
        %v250 = vpop.xlane.xlu0 %249
        %251 = vadd.xlane.f32.xlu0 %v205
        %v252 = vpop.xlane.xlu0 %251
        %253 = vadd.xlane.f32.xlu0 %v206
        %v254 = vpop.xlane.xlu0 %253
        %255 = vadd.xlane.f32.xlu0 %v207
        %v256 = vpop.xlane.xlu0 %255
        %257 = vadd.xlane.f32.xlu0 %v208
        %v258 = vpop.xlane.xlu0 %257
        %259 = vadd.xlane.f32.xlu0 %v209
        %v260 = vpop.xlane.xlu0 %259
        %261 = vadd.xlane.f32.xlu0 %v210
        %v262 = vpop.xlane.xlu0 %261
        %263 = vadd.xlane.f32.xlu0 %v211
        %v264 = vpop.xlane.xlu0 %263
        %265 = vadd.xlane.f32.xlu0 %v212
        %v266 = vpop.xlane.xlu0 %265
        %267 = vadd.xlane.f32.xlu0 %v213
        %v268 = vpop.xlane.xlu0 %267
        %269 = vadd.xlane.f32.xlu0 %v214
        %v270 = vpop.xlane.xlu0 %269
        %271 = vadd.xlane.f32.xlu0 %v215
        %v272 = vpop.xlane.xlu0 %271
        %273 = vadd.xlane.f32.xlu0 %v216
        %v274 = vpop.xlane.xlu0 %273
        %275 = vadd.xlane.f32.xlu0 %v217
        %v276 = vpop.xlane.xlu0 %275
        %277 = vadd.xlane.f32.xlu0 %v218
        %v278 = vpop.xlane.xlu0 %277
        %279 = vadd.xlane.f32.xlu0 %v219
        %v280 = vpop.xlane.xlu0 %279
        %281 = vadd.xlane.f32.xlu0 %v220
        %v282 = vpop.xlane.xlu0 %281
        %283 = vadd.xlane.f32.xlu0 %v221
        %v284 = vpop.xlane.xlu0 %283
        %285 = vadd.xlane.f32.xlu0 %v222
        %v286 = vpop.xlane.xlu0 %285
        %v287 = vrcp.pop 128.0
        %v288 = vmul.f32 %v224, %v287
        %v289 = vmul.f32 %v226, %v287
        %v290 = vmul.f32 %v228, %v287
        %v291 = vmul.f32 %v230, %v287
        %v292 = vmul.f32 %v232, %v287
        %v293 = vmul.f32 %v234, %v287
        %v294 = vmul.f32 %v236, %v287
        %v295 = vmul.f32 %v238, %v287
        %v296 = vmul.f32 %v240, %v287
        %v297 = vmul.f32 %v242, %v287
        %v298 = vmul.f32 %v244, %v287
        %v299 = vmul.f32 %v246, %v287
        %v300 = vmul.f32 %v248, %v287
        %v301 = vmul.f32 %v250, %v287
        %v302 = vmul.f32 %v252, %v287
        %v303 = vmul.f32 %v254, %v287
        %v304 = vmul.f32 %v256, %v287
        %v305 = vmul.f32 %v258, %v287
        %v306 = vmul.f32 %v260, %v287
        %v307 = vmul.f32 %v262, %v287
        %v308 = vmul.f32 %v264, %v287
        %v309 = vmul.f32 %v266, %v287
        %v310 = vmul.f32 %v268, %v287
        %v311 = vmul.f32 %v270, %v287
        %v312 = vmul.f32 %v272, %v287
        %v313 = vmul.f32 %v274, %v287
        %v314 = vmul.f32 %v276, %v287
        %v315 = vmul.f32 %v278, %v287
        %v316 = vmul.f32 %v280, %v287
        %v317 = vmul.f32 %v282, %v287
        %v318 = vmul.f32 %v284, %v287
        %v319 = vmul.f32 %v286, %v287
        %v320 = vsub.f32 %v191, %v288
        %v321 = vsub.f32 %v192, %v289
        %v322 = vsub.f32 %v193, %v290
        %v323 = vsub.f32 %v194, %v291
        %v324 = vsub.f32 %v195, %v292
        %v325 = vsub.f32 %v196, %v293
        %v326 = vsub.f32 %v197, %v294
        %v327 = vsub.f32 %v198, %v295
        %v328 = vsub.f32 %v199, %v296
        %v329 = vsub.f32 %v200, %v297
        %v330 = vsub.f32 %v201, %v298
        %v331 = vsub.f32 %v202, %v299
        %v332 = vsub.f32 %v203, %v300
        %v333 = vsub.f32 %v204, %v301
        %v334 = vsub.f32 %v205, %v302
        %v335 = vsub.f32 %v206, %v303
        %v336 = vsub.f32 %v207, %v304
        %v337 = vsub.f32 %v208, %v305
        %v338 = vsub.f32 %v209, %v306
        %v339 = vsub.f32 %v210, %v307
        %v340 = vsub.f32 %v211, %v308
        %v341 = vsub.f32 %v212, %v309
        %v342 = vsub.f32 %v213, %v310
        %v343 = vsub.f32 %v214, %v311
        %v344 = vsub.f32 %v215, %v312
        %v345 = vsub.f32 %v216, %v313
        %v346 = vsub.f32 %v217, %v314
        %v347 = vsub.f32 %v218, %v315
        %v348 = vsub.f32 %v219, %v316
        %v349 = vsub.f32 %v220, %v317
        %v350 = vsub.f32 %v221, %v318
        %v351 = vsub.f32 %v222, %v319
        %v352 = vmul.f32 %v320, %v320
        %v353 = vmul.f32 %v321, %v321
        %v354 = vmul.f32 %v322, %v322
        %v355 = vmul.f32 %v323, %v323
        %v356 = vmul.f32 %v324, %v324
        %v357 = vmul.f32 %v325, %v325
        %v358 = vmul.f32 %v326, %v326
        %v359 = vmul.f32 %v327, %v327
        %v360 = vmul.f32 %v328, %v328
        %v361 = vmul.f32 %v329, %v329
        %v362 = vmul.f32 %v330, %v330
        %v363 = vmul.f32 %v331, %v331
        %v364 = vmul.f32 %v332, %v332
        %v365 = vmul.f32 %v333, %v333
        %v366 = vmul.f32 %v334, %v334
        %v367 = vmul.f32 %v335, %v335
        %v368 = vmul.f32 %v336, %v336
        %v369 = vmul.f32 %v337, %v337
        %v370 = vmul.f32 %v338, %v338
        %v371 = vmul.f32 %v339, %v339
        %v372 = vmul.f32 %v340, %v340
        %v373 = vmul.f32 %v341, %v341
        %v374 = vmul.f32 %v342, %v342
        %v375 = vmul.f32 %v343, %v343
        %v376 = vmul.f32 %v344, %v344
        %v377 = vmul.f32 %v345, %v345
        %v378 = vmul.f32 %v346, %v346
        %v379 = vmul.f32 %v347, %v347
        %v380 = vmul.f32 %v348, %v348
        %v381 = vmul.f32 %v349, %v349
        %v382 = vmul.f32 %v350, %v350
        %v383 = vmul.f32 %v351, %v351
        %384 = vadd.xlane.f32.xlu0 %v352
        %v385 = vpop.xlane.xlu0 %384
        %386 = vadd.xlane.f32.xlu0 %v353
        %v387 = vpop.xlane.xlu0 %386
        %388 = vadd.xlane.f32.xlu0 %v354
        %v389 = vpop.xlane.xlu0 %388
        %390 = vadd.xlane.f32.xlu0 %v355
        %v391 = vpop.xlane.xlu0 %390
        %392 = vadd.xlane.f32.xlu0 %v356
        %v393 = vpop.xlane.xlu0 %392
        %394 = vadd.xlane.f32.xlu0 %v357
        %v395 = vpop.xlane.xlu0 %394
        %396 = vadd.xlane.f32.xlu0 %v358
        %v397 = vpop.xlane.xlu0 %396
        %398 = vadd.xlane.f32.xlu0 %v359
        %v399 = vpop.xlane.xlu0 %398
        %400 = vadd.xlane.f32.xlu0 %v360
        %v401 = vpop.xlane.xlu0 %400
        %402 = vadd.xlane.f32.xlu0 %v361
        %v403 = vpop.xlane.xlu0 %402
        %404 = vadd.xlane.f32.xlu0 %v362
        %v405 = vpop.xlane.xlu0 %404
        %406 = vadd.xlane.f32.xlu0 %v363
        %v407 = vpop.xlane.xlu0 %406
        %408 = vadd.xlane.f32.xlu0 %v364
        %v409 = vpop.xlane.xlu0 %408
        %410 = vadd.xlane.f32.xlu0 %v365
        %v411 = vpop.xlane.xlu0 %410
        %412 = vadd.xlane.f32.xlu0 %v366
        %v413 = vpop.xlane.xlu0 %412
        %414 = vadd.xlane.f32.xlu0 %v367
        %v415 = vpop.xlane.xlu0 %414
        %416 = vadd.xlane.f32.xlu0 %v368
        %v417 = vpop.xlane.xlu0 %416
        %418 = vadd.xlane.f32.xlu0 %v369
        %v419 = vpop.xlane.xlu0 %418
        %420 = vadd.xlane.f32.xlu0 %v370
        %v421 = vpop.xlane.xlu0 %420
        %422 = vadd.xlane.f32.xlu0 %v371
        %v423 = vpop.xlane.xlu0 %422
        %424 = vadd.xlane.f32.xlu0 %v372
        %v425 = vpop.xlane.xlu0 %424
        %426 = vadd.xlane.f32.xlu0 %v373
        %v427 = vpop.xlane.xlu0 %426
        %428 = vadd.xlane.f32.xlu0 %v374
        %v429 = vpop.xlane.xlu0 %428
        %430 = vadd.xlane.f32.xlu0 %v375
        %v431 = vpop.xlane.xlu0 %430
        %432 = vadd.xlane.f32.xlu0 %v376
        %v433 = vpop.xlane.xlu0 %432
        %434 = vadd.xlane.f32.xlu0 %v377
        %v435 = vpop.xlane.xlu0 %434
        %436 = vadd.xlane.f32.xlu0 %v378
        %v437 = vpop.xlane.xlu0 %436
        %438 = vadd.xlane.f32.xlu0 %v379
        %v439 = vpop.xlane.xlu0 %438
        %440 = vadd.xlane.f32.xlu0 %v380
        %v441 = vpop.xlane.xlu0 %440
        %442 = vadd.xlane.f32.xlu0 %v381
        %v443 = vpop.xlane.xlu0 %442
        %444 = vadd.xlane.f32.xlu0 %v382
        %v445 = vpop.xlane.xlu0 %444
        %446 = vadd.xlane.f32.xlu0 %v383
        %v447 = vpop.xlane.xlu0 %446
        %v448 = vmul.f32 %v385, %v287
        %v449 = vmul.f32 %v387, %v287
        %v450 = vmul.f32 %v389, %v287
        %v451 = vmul.f32 %v391, %v287
        %v452 = vmul.f32 %v393, %v287
        %v453 = vmul.f32 %v395, %v287
        %v454 = vmul.f32 %v397, %v287
        %v455 = vmul.f32 %v399, %v287
        %v456 = vmul.f32 %v401, %v287
        %v457 = vmul.f32 %v403, %v287
        %v458 = vmul.f32 %v405, %v287
        %v459 = vmul.f32 %v407, %v287
        %v460 = vmul.f32 %v409, %v287
        %v461 = vmul.f32 %v411, %v287
        %v462 = vmul.f32 %v413, %v287
        %v463 = vmul.f32 %v415, %v287
        %v464 = vmul.f32 %v417, %v287
        %v465 = vmul.f32 %v419, %v287
        %v466 = vmul.f32 %v421, %v287
        %v467 = vmul.f32 %v423, %v287
        %v468 = vmul.f32 %v425, %v287
        %v469 = vmul.f32 %v427, %v287
        %v470 = vmul.f32 %v429, %v287
        %v471 = vmul.f32 %v431, %v287
        %v472 = vmul.f32 %v433, %v287
        %v473 = vmul.f32 %v435, %v287
        %v474 = vmul.f32 %v437, %v287
        %v475 = vmul.f32 %v439, %v287
        %v476 = vmul.f32 %v441, %v287
        %v477 = vmul.f32 %v443, %v287
        %v478 = vmul.f32 %v445, %v287
        %v479 = vmul.f32 %v447, %v287
        %v480 = vadd.f32 %v448, 1e-05
        %v481 = vadd.f32 %v449, 1e-05
        %v482 = vadd.f32 %v450, 1e-05
        %v483 = vadd.f32 %v451, 1e-05
        %v484 = vadd.f32 %v452, 1e-05
        %v485 = vadd.f32 %v453, 1e-05
        %v486 = vadd.f32 %v454, 1e-05
        %v487 = vadd.f32 %v455, 1e-05
        %v488 = vadd.f32 %v456, 1e-05
        %v489 = vadd.f32 %v457, 1e-05
        %v490 = vadd.f32 %v458, 1e-05
        %v491 = vadd.f32 %v459, 1e-05
        %v492 = vadd.f32 %v460, 1e-05
        %v493 = vadd.f32 %v461, 1e-05
        %v494 = vadd.f32 %v462, 1e-05
        %v495 = vadd.f32 %v463, 1e-05
        %v496 = vadd.f32 %v464, 1e-05
        %v497 = vadd.f32 %v465, 1e-05
        %v498 = vadd.f32 %v466, 1e-05
        %v499 = vadd.f32 %v467, 1e-05
        %v500 = vadd.f32 %v468, 1e-05
        %v501 = vadd.f32 %v469, 1e-05
        %v502 = vadd.f32 %v470, 1e-05
        %v503 = vadd.f32 %v471, 1e-05
        %v504 = vadd.f32 %v472, 1e-05
        %v505 = vadd.f32 %v473, 1e-05
        %v506 = vadd.f32 %v474, 1e-05
        %v507 = vadd.f32 %v475, 1e-05
        %v508 = vadd.f32 %v476, 1e-05
        %v509 = vadd.f32 %v477, 1e-05
        %v510 = vadd.f32 %v478, 1e-05
        %v511 = vadd.f32 %v479, 1e-05
        %v512 = vrsqrt.pop %v480
        %v513 = vrsqrt.pop %v481
        %v514 = vrsqrt.pop %v482
        %v515 = vrsqrt.pop %v483
        %v516 = vrsqrt.pop %v484
        %v517 = vrsqrt.pop %v485
        %v518 = vrsqrt.pop %v486
        %v519 = vrsqrt.pop %v487
        %v520 = vrsqrt.pop %v488
        %v521 = vrsqrt.pop %v489
        %v522 = vrsqrt.pop %v490
        %v523 = vrsqrt.pop %v491
        %v524 = vrsqrt.pop %v492
        %v525 = vrsqrt.pop %v493
        %v526 = vrsqrt.pop %v494
        %v527 = vrsqrt.pop %v495
        %v528 = vrsqrt.pop %v496
        %v529 = vrsqrt.pop %v497
        %v530 = vrsqrt.pop %v498
        %v531 = vrsqrt.pop %v499
        %v532 = vrsqrt.pop %v500
        %v533 = vrsqrt.pop %v501
        %v534 = vrsqrt.pop %v502
        %v535 = vrsqrt.pop %v503
        %v536 = vrsqrt.pop %v504
        %v537 = vrsqrt.pop %v505
        %v538 = vrsqrt.pop %v506
        %v539 = vrsqrt.pop %v507
        %v540 = vrsqrt.pop %v508
        %v541 = vrsqrt.pop %v509
        %v542 = vrsqrt.pop %v510
        %v543 = vrsqrt.pop %v511
        %v544 = vld [vmem:[%s1] sm:$0x1]
        %v545 = vld [vmem:[%s2] sm:$0x1]
        %v546 = vmul.f32 %v320, %v512
        %v547 = vmul.f32 %v321, %v513
        %v548 = vmul.f32 %v322, %v514
        %v549 = vmul.f32 %v323, %v515
        %v550 = vmul.f32 %v324, %v516
        %v551 = vmul.f32 %v325, %v517
        %v552 = vmul.f32 %v326, %v518
        %v553 = vmul.f32 %v327, %v519
        %v554 = vmul.f32 %v328, %v520
        %v555 = vmul.f32 %v329, %v521
        %v556 = vmul.f32 %v330, %v522
        %v557 = vmul.f32 %v331, %v523
        %v558 = vmul.f32 %v332, %v524
        %v559 = vmul.f32 %v333, %v525
        %v560 = vmul.f32 %v334, %v526
        %v561 = vmul.f32 %v335, %v527
        %v562 = vmul.f32 %v336, %v528
        %v563 = vmul.f32 %v337, %v529
        %v564 = vmul.f32 %v338, %v530
        %v565 = vmul.f32 %v339, %v531
        %v566 = vmul.f32 %v340, %v532
        %v567 = vmul.f32 %v341, %v533
        %v568 = vmul.f32 %v342, %v534
        %v569 = vmul.f32 %v343, %v535
        %v570 = vmul.f32 %v344, %v536
        %v571 = vmul.f32 %v345, %v537
        %v572 = vmul.f32 %v346, %v538
        %v573 = vmul.f32 %v347, %v539
        %v574 = vmul.f32 %v348, %v540
        %v575 = vmul.f32 %v349, %v541
        %v576 = vmul.f32 %v350, %v542
        %v577 = vmul.f32 %v351, %v543
        %v579 = vlaneseq
        %v580 = vshrl.u32 %v579, 7
        %v581 = vsub.s32 0, %v580
        %v582 = vrot.slane %v544, %v581
        %v584 = vmul.f32 %v546, %v582
        %v585 = vmul.f32 %v547, %v582
        %v586 = vmul.f32 %v548, %v582
        %v587 = vmul.f32 %v549, %v582
        %v588 = vmul.f32 %v550, %v582
        %v589 = vmul.f32 %v551, %v582
        %v590 = vmul.f32 %v552, %v582
        %v591 = vmul.f32 %v553, %v582
        %v592 = vmul.f32 %v554, %v582
        %v593 = vmul.f32 %v555, %v582
        %v594 = vmul.f32 %v556, %v582
        %v595 = vmul.f32 %v557, %v582
        %v596 = vmul.f32 %v558, %v582
        %v597 = vmul.f32 %v559, %v582
        %v598 = vmul.f32 %v560, %v582
        %v599 = vmul.f32 %v561, %v582
        %v600 = vmul.f32 %v562, %v582
        %v601 = vmul.f32 %v563, %v582
        %v602 = vmul.f32 %v564, %v582
        %v603 = vmul.f32 %v565, %v582
        %v604 = vmul.f32 %v566, %v582
        %v605 = vmul.f32 %v567, %v582
        %v606 = vmul.f32 %v568, %v582
        %v607 = vmul.f32 %v569, %v582
        %v608 = vmul.f32 %v570, %v582
        %v609 = vmul.f32 %v571, %v582
        %v610 = vmul.f32 %v572, %v582
        %v611 = vmul.f32 %v573, %v582
        %v612 = vmul.f32 %v574, %v582
        %v613 = vmul.f32 %v575, %v582
        %v614 = vmul.f32 %v576, %v582
        %v615 = vmul.f32 %v577, %v582
        %v617 = vlaneseq
        %v618 = vshrl.u32 %v617, 7
        %v619 = vsub.s32 0, %v618
        %v620 = vrot.slane %v545, %v619
        %v622 = vadd.f32 %v584, %v620
        %v623 = vadd.f32 %v585, %v620
        %v624 = vadd.f32 %v586, %v620
        %v625 = vadd.f32 %v587, %v620
        %v626 = vadd.f32 %v588, %v620
        %v627 = vadd.f32 %v589, %v620
        %v628 = vadd.f32 %v590, %v620
        %v629 = vadd.f32 %v591, %v620
        %v630 = vadd.f32 %v592, %v620
        %v631 = vadd.f32 %v593, %v620
        %v632 = vadd.f32 %v594, %v620
        %v633 = vadd.f32 %v595, %v620
        %v634 = vadd.f32 %v596, %v620
        %v635 = vadd.f32 %v597, %v620
        %v636 = vadd.f32 %v598, %v620
        %v637 = vadd.f32 %v599, %v620
        %v638 = vadd.f32 %v600, %v620
        %v639 = vadd.f32 %v601, %v620
        %v640 = vadd.f32 %v602, %v620
        %v641 = vadd.f32 %v603, %v620
        %v642 = vadd.f32 %v604, %v620
        %v643 = vadd.f32 %v605, %v620
        %v644 = vadd.f32 %v606, %v620
        %v645 = vadd.f32 %v607, %v620
        %v646 = vadd.f32 %v608, %v620
        %v647 = vadd.f32 %v609, %v620
        %v648 = vadd.f32 %v610, %v620
        %v649 = vadd.f32 %v611, %v620
        %v650 = vadd.f32 %v612, %v620
        %v651 = vadd.f32 %v613, %v620
        %v652 = vadd.f32 %v614, %v620
        %v653 = vadd.f32 %v615, %v620
        %654 = vst [vmem:[%s188] sm:$0xff] %v622
        %655 = vst [vmem:[%s188 + $0x8] sm:$0xff] %v623
        %656 = vst [vmem:[%s188 + $0x10] sm:$0xff] %v624
        %657 = vst [vmem:[%s188 + $0x18] sm:$0xff] %v625
        %658 = vst [vmem:[%s188 + $0x20] sm:$0xff] %v626
        %659 = vst [vmem:[%s188 + $0x28] sm:$0xff] %v627
        %660 = vst [vmem:[%s188 + $0x30] sm:$0xff] %v628
        %661 = vst [vmem:[%s188 + $0x38] sm:$0xff] %v629
        %662 = vst [vmem:[%s188 + $0x40] sm:$0xff] %v630
        %663 = vst [vmem:[%s188 + $0x48] sm:$0xff] %v631
        %664 = vst [vmem:[%s188 + $0x50] sm:$0xff] %v632
        %665 = vst [vmem:[%s188 + $0x58] sm:$0xff] %v633
        %666 = vst [vmem:[%s188 + $0x60] sm:$0xff] %v634
        %667 = vst [vmem:[%s188 + $0x68] sm:$0xff] %v635
        %668 = vst [vmem:[%s188 + $0x70] sm:$0xff] %v636
        %669 = vst [vmem:[%s188 + $0x78] sm:$0xff] %v637
        %670 = vst [vmem:[%s188 + $0x80] sm:$0xff] %v638
        %671 = vst [vmem:[%s188 + $0x88] sm:$0xff] %v639
        %672 = vst [vmem:[%s188 + $0x90] sm:$0xff] %v640
        %673 = vst [vmem:[%s188 + $0x98] sm:$0xff] %v641
        %674 = vst [vmem:[%s188 + $0xa0] sm:$0xff] %v642
        %675 = vst [vmem:[%s188 + $0xa8] sm:$0xff] %v643
        %676 = vst [vmem:[%s188 + $0xb0] sm:$0xff] %v644
        %677 = vst [vmem:[%s188 + $0xb8] sm:$0xff] %v645
        %678 = vst [vmem:[%s188 + $0xc0] sm:$0xff] %v646
        %679 = vst [vmem:[%s188 + $0xc8] sm:$0xff] %v647
        %680 = vst [vmem:[%s188 + $0xd0] sm:$0xff] %v648
        %681 = vst [vmem:[%s188 + $0xd8] sm:$0xff] %v649
        %682 = vst [vmem:[%s188 + $0xe0] sm:$0xff] %v650
        %683 = vst [vmem:[%s188 + $0xe8] sm:$0xff] %v651
        %684 = vst [vmem:[%s188 + $0xf0] sm:$0xff] %v652
        %685 = vst [vmem:[%s188 + $0xf8] sm:$0xff] %v653
        %s686 = sand.u32 %s96, 1
        %s687 = scalar_lea.sflag [#allocation4], %s686
        %s688 = sand.u32 %s96, 1
        %s689 = smul.addr %s688, 256
        %s690 = scalar_lea.vmem [#allocation5], %s689
        // Predicated region
        $region37: #{tpu_custom_call.1} parent=31 // pred_check
          %p691 = pneg %p106
        $region38: #{tpu_custom_call.1} parent=31 // pred_check_branch
          %693 = sbr.rel (%p691) target = $region40
        $region39: #{tpu_custom_call.1} parent=31 // pred_region
          %s694 = smul.u32 32, %s20
          %s696 = ssub.s32 4096, 4096
          %697 = vsyncadd %s687, %s696
          %s698 = smul.addr %s694, 128
          %s699 = scalar_lea.hbm %s3, %s698
          %s700 = sshll.u32 %s690, 4
          %s701 = int_to_ptr.vmem [resolvable:$true] %s700
          %706 = dma.vmem_to_hbm [thread:$0]  %s701, 4096, %s699, %s687, 128, 128, 8
        $region40: #{tpu_custom_call.1} parent=31 // pred_fallthru
          _
      $region32: #{tpu_custom_call.1} parent=5 // pred_fallthru
        _
      %p707 = scmp.le.s32.totalorder 2, %s15
      // Predicated region
      $region41: #{tpu_custom_call.1} parent=5 // pred_check
        %p708 = pneg %p707
      $region42: #{tpu_custom_call.1} parent=5 // pred_check_branch
        %710 = sbr.rel (%p708) target = $region44
      $region43: #{tpu_custom_call.1} parent=5 // pred_region
        %s711 = ssub.s32 %s15, 2
        // Predicated region
        $region45: #{tpu_custom_call.1} parent=43 // pred_check
          %p712 = pneg %p112
        $region46: #{tpu_custom_call.1} parent=43 // pred_check_branch
          %714 = sbr.rel (%p712) target = $region48
        $region47: #{tpu_custom_call.1} parent=43 // pred_region
          %s715 = sand.u32 %s97, 1
          %s716 = scalar_lea.sflag [#allocation4], %s715
          %s717 = sand.u32 %s97, 1
          %s718 = smul.addr %s717, 256
          %s719 = scalar_lea.vmem [#allocation5], %s718
          %720 = dma.done %s716, 4096
        $region48: #{tpu_custom_call.1} parent=43 // pred_fallthru
          _
      $region44: #{tpu_custom_call.1} parent=5 // pred_fallthru
        _
    $region6: #{tpu_custom_call.1} parent=1 // loop_footer
      %s19 = sadd.s32 1, %s15
    $region7: #{tpu_custom_call.1} parent=1 // loop_footer_branch
      %14 = sbr.rel target = $region3
    $region8: #{tpu_custom_call.1} parent=1 // loop_exit
      _
    %721 = vsyncpa [#allocation3], 1
    %s722 = scalar_lea.sflag [#allocation3], 1
    %723 = vsyncpa %s722, 1
    %724 = vsyncpa [#allocation4], 1
    %s725 = scalar_lea.sflag [#allocation4], 1
    %726 = vsyncpa %s725, 1

</llo_original>
